<compile_context>
chip_gen: v5e
topology: v5e:2x2
jax: 0.10.0
libtpu: 0.0.40
codegen_flags: <defaults>
</compile_context>

<pallas_src>
import math

import jax
import jax.numpy as jnp
from jax.experimental import pallas as pl
from jax.experimental.pallas import tpu as pltpu


IN_FEATURES = 2
HIDDEN = 64
PACKED = IN_FEATURES + 2          # [x0, x1, step, target_step] along the sublane axis
DEFAULT_TILE_B = 4096             # lanes per grid step (batch axis)


def _round_up(n, m):
    return ((n + m - 1) // m) * m


def _ctm_kernel(x_ref,                        # (4, TILE_B)  f32  raw packed inputs
                w1_ref, b1_ref,               # (64, 4) f32 (norm folded), (64, 1) f32
                w2_ref, b2_ref,               # (64, 64) mm_dtype, (64, 1) f32
                w3_ref, b3_ref,               # (64, 64) mm_dtype, (64, 1) f32
                w4_ref, b4_ref,               # (2, 64)  mm_dtype (scale folded), (2, 1) f32
                out_ref):                     # (2, TILE_B) f32
    x = x_ref[...]                            # (4, TILE_B)
    w1 = w1_ref[...]                          # (64, 4), input normalization pre-folded

    # linear1: Linear(4, 64) in feature-major form as 4 VPU broadcast-FMAs.
    # (A contraction depth of 4 would waste the 128/256-deep MXU; the VALU slots
    #  are otherwise idle while the MXU runs linear2/3/4.)
    h = w1[:, 0:1] * x[0:1, :]
    h = h + w1[:, 1:2] * x[1:2, :]
    h = h + w1[:, 2:3] * x[2:3, :]
    h = h + w1[:, 3:4] * x[3:4, :]
    h = jnp.maximum(h + b1_ref[...], 0.0)     # (64, TILE_B) f32

    # Hidden matmuls on the MXU, lane axis = batch (fully dense), f32 accumulation.
    mm = w2_ref.dtype
    h = jnp.dot(w2_ref[...], h.astype(mm), preferred_element_type=jnp.float32)
    h = jnp.maximum(h + b2_ref[...], 0.0)
    h = jnp.dot(w3_ref[...], h.astype(mm), preferred_element_type=jnp.float32)
    h = jnp.maximum(h + b3_ref[...], 0.0)
    out = jnp.dot(w4_ref[...], h.astype(mm), preferred_element_type=jnp.float32)

    # Output scale (sqrt(2)*max_step) already folded into w4/b4.  Lane-dense store.
    out_ref[...] = out + b4_ref[...]


def init_params(key, max_step):
    """Parameters in PyTorch nn.Linear layout: w (out, in), b (out,), default init."""
    del max_step
    ks = jax.random.split(key, 8)

    def linear(kw, kb, fan_in, fan_out):
        bound = 1.0 / math.sqrt(fan_in)
        w = jax.random.uniform(kw, (fan_out, fan_in), jnp.float32, -bound, bound)
        b = jax.random.uniform(kb, (fan_out,), jnp.float32, -bound, bound)
        return w, b

    w1, b1 = linear(ks[0], ks[1], IN_FEATURES + 2, HIDDEN)   # (64, 4),  (64,)
    w2, b2 = linear(ks[2], ks[3], HIDDEN, HIDDEN)            # (64, 64), (64,)
    w3, b3 = linear(ks[4], ks[5], HIDDEN, HIDDEN)            # (64, 64), (64,)
    w4, b4 = linear(ks[6], ks[7], HIDDEN, IN_FEATURES)       # (2, 64),  (2,)
    return dict(w1=w1, b1=b1, w2=w2, b2=b2, w3=w3, b3=b3, w4=w4, b4=b4)


def ctm_forward(params, inp, step, target_step, max_step,
                *, matmul_dtype=jnp.bfloat16, tile_b=DEFAULT_TILE_B):
    """Pallas-backed forward pass of ConsistencyTrajectoryModel.

    Returns (B, 2), matching the PyTorch module.
    """
    B = inp.shape[0]
    scale = math.sqrt(2.0) * float(max_step)

    # --- batch tiling: lane axis, multiples of 128, keep >= 2 grid steps if possible
    tile_b = max(128, (int(tile_b) // 128) * 128)
    b_ceil = _round_up(B, 128)
    if tile_b * 2 > b_ceil and b_ceil >= 256:      # give both v7x TensorCores work
        tile_b = max(128, ((b_ceil // 2) // 128) * 128)
    tile_b = min(tile_b, b_ceil)
    b_pad = _round_up(B, tile_b)
    grid = (b_pad // tile_b,)

    # --- feature-major packed input (4, b_pad): [x0; x1; step; target_step]
    # (single fused transpose+concat+pad materialization; one lane-dense DMA per step)
    x_fm = jnp.concatenate(
        [inp.astype(jnp.float32).T,
         step.astype(jnp.float32).reshape(1, B),
         target_step.astype(jnp.float32).reshape(1, B)], axis=0)
    if b_pad != B:
        x_fm = jnp.pad(x_fm, ((0, 0), (0, b_pad - B)))

    # --- fold normalization into w1 columns and the output scale into w4/b4
    # (folded into the f32 copies before any bf16 cast).
    col_scale = jnp.array(
        [[1.0 / scale, 1.0 / scale, 1.0 / float(max_step), 1.0 / float(max_step)]],
        jnp.float32)                                                  # (1, 4)
    w1 = params["w1"].astype(jnp.float32) * col_scale                 # (64, 4) f32 (VPU)
    b1 = params["b1"].astype(jnp.float32).reshape(HIDDEN, 1)
    w2 = params["w2"].astype(matmul_dtype)                            # (64, 64)
    b2 = params["b2"].astype(jnp.float32).reshape(HIDDEN, 1)
    w3 = params["w3"].astype(matmul_dtype)                            # (64, 64)
    b3 = params["b3"].astype(jnp.float32).reshape(HIDDEN, 1)
    w4 = (params["w4"].astype(jnp.float32) * scale).astype(matmul_dtype)   # (2, 64)
    b4 = (params["b4"].astype(jnp.float32) * scale).reshape(IN_FEATURES, 1)

    weights = (w1, b1, w2, b2, w3, b3, w4, b4)

    data_spec = pl.BlockSpec((PACKED, tile_b), lambda i: (0, i))
    out_spec = pl.BlockSpec((IN_FEATURES, tile_b), lambda i: (0, i))
    # Constant index_map: weight/bias tiles are identical for every grid step, so
    # they stay VMEM-resident and are fetched from HBM only once.
    weight_specs = [pl.BlockSpec(tuple(w.shape), lambda i: (0, 0)) for w in weights]

    flops = 2 * b_pad * (PACKED * HIDDEN + 2 * HIDDEN * HIDDEN + HIDDEN * IN_FEATURES)
    weight_bytes = sum(int(w.size) * int(jnp.dtype(w.dtype).itemsize) for w in weights)
    bytes_accessed = b_pad * (PACKED + IN_FEATURES) * 4 + weight_bytes

    # VMEM budget: double-buffered lane-dense in/out streams + f32/bf16 intermediates.
    est = (2 * 2 * 8 * tile_b * 4) + (10 * HIDDEN * tile_b * 4) + (1 << 20)
    vmem_limit = int(min(48 * 1024 * 1024, max(16 * 1024 * 1024, 2 * est)))

    out_fm = pl.pallas_call(
        _ctm_kernel,
        out_shape=jax.ShapeDtypeStruct((IN_FEATURES, b_pad), jnp.float32),
        grid=grid,
        in_specs=[data_spec] + weight_specs,
        out_specs=out_spec,
        compiler_params=pltpu.CompilerParams(
            dimension_semantics=("parallel",),       # megacore sharding on v7x
            vmem_limit_bytes=vmem_limit),
        cost_estimate=pl.CostEstimate(
            flops=flops, transcendentals=0, bytes_accessed=bytes_accessed),
    )(x_fm, *weights)

    return out_fm[:, :B].T                           # (B, 2), module semantics


def ctm_forward_ref(params, inp, step, target_step, max_step):
    """Pure-JAX reference matching the PyTorch module."""
    scale = math.sqrt(2.0) * float(max_step)
    x = inp.astype(jnp.float32) / scale
    s = (step.astype(jnp.float32) / float(max_step))[:, None]
    t = (target_step.astype(jnp.float32) / float(max_step))[:, None]
    x = jnp.concatenate([x, s, t], axis=-1)
    h = jnp.maximum(x @ params["w1"].T + params["b1"], 0.0)
    h = jnp.maximum(h @ params["w2"].T + params["b2"], 0.0)
    h = jnp.maximum(h @ params["w3"].T + params["b3"], 0.0)
    return scale * (h @ params["w4"].T + params["b4"])


if __name__ == "__main__":
    MAX_STEP = 100

    key = jax.random.PRNGKey(0)
    k_param, k_x, k_s, k_t = jax.random.split(key, 4)
    params = init_params(k_param, MAX_STEP)

    # Small primary test: batch = 8.
    B = 8
    x = jax.random.normal(k_x, (B, IN_FEATURES), jnp.float32) * MAX_STEP
    step = jax.random.uniform(k_s, (B,), jnp.float32, 0.0, MAX_STEP)
    target_step = jax.random.uniform(k_t, (B,), jnp.float32, 0.0, MAX_STEP)

    ref = ctm_forward_ref(params, x, step, target_step, MAX_STEP)

    # f32 MXU path (tight tolerance).
    out_f32 = jax.block_until_ready(
        ctm_forward(params, x, step, target_step, MAX_STEP,
                    matmul_dtype=jnp.float32))
    assert out_f32.shape == (B, IN_FEATURES)
    assert jnp.allclose(out_f32, ref, atol=1e-2, rtol=1e-3), (out_f32, ref)

    # Default bf16 MXU path (looser tolerance; f32 accumulation).
    out_bf16 = jax.block_until_ready(
        ctm_forward(params, x, step, target_step, MAX_STEP))
    assert out_bf16.shape == (B, IN_FEATURES)
    assert jnp.allclose(out_bf16, ref, atol=1.0, rtol=3e-2), (out_bf16, ref)

    # Exercise a multi-step batch grid + padding remainder: B=300, TILE_B=128 -> grid=(3,).
    B2 = 300
    k_x2, k_s2, k_t2 = jax.random.split(jax.random.PRNGKey(1), 3)
    x2 = jax.random.normal(k_x2, (B2, IN_FEATURES), jnp.float32) * MAX_STEP
    step2 = jax.random.uniform(k_s2, (B2,), jnp.float32, 0.0, MAX_STEP)
    tstep2 = jax.random.uniform(k_t2, (B2,), jnp.float32, 0.0, MAX_STEP)
    ref2 = ctm_forward_ref(params, x2, step2, tstep2, MAX_STEP)
    out2 = jax.block_until_ready(
        ctm_forward(params, x2, step2, tstep2, MAX_STEP,
                    matmul_dtype=jnp.float32, tile_b=128))
    assert out2.shape == (B2, IN_FEATURES)
    assert jnp.allclose(out2, ref2, atol=1e-2, rtol=1e-3), (out2, ref2)

    print("KERNEL_OK")
</pallas_src>

<mosaic_0001>
module attributes {stable_mosaic.version = 11 : i64} {
  func.func @_ctm_kernel(%arg0: i32, %arg1: memref<4x128xf32, #tpu.memory_space<vmem>>, %arg2: memref<64x4xf32, #tpu.memory_space<vmem>>, %arg3: memref<64x1xf32, #tpu.memory_space<vmem>>, %arg4: memref<64x64xf32, #tpu.memory_space<vmem>>, %arg5: memref<64x1xf32, #tpu.memory_space<vmem>>, %arg6: memref<64x64xf32, #tpu.memory_space<vmem>>, %arg7: memref<64x1xf32, #tpu.memory_space<vmem>>, %arg8: memref<2x64xf32, #tpu.memory_space<vmem>>, %arg9: memref<2x1xf32, #tpu.memory_space<vmem>>, %arg10: memref<2x128xf32, #tpu.memory_space<vmem>>) attributes {dimension_semantics = [#tpu.dimension_semantics<parallel>], iteration_bounds = array<i64: 1>, scalar_prefetch = 0 : i64, scratch_operands = 0 : i64, tpu.core_type = #tpu.core_type<tc>, window_params = [{transform_indices = @transform_0, window_bounds = array<i64: 4, 128>}, {pipeline_mode = #tpu.pipeline_mode<synchronous>, transform_indices = @transform_1, window_bounds = array<i64: 64, 4>}, {pipeline_mode = #tpu.pipeline_mode<synchronous>, transform_indices = @transform_2, window_bounds = array<i64: 64, 1>}, {pipeline_mode = #tpu.pipeline_mode<synchronous>, transform_indices = @transform_3, window_bounds = array<i64: 64, 64>}, {pipeline_mode = #tpu.pipeline_mode<synchronous>, transform_indices = @transform_4, window_bounds = array<i64: 64, 1>}, {pipeline_mode = #tpu.pipeline_mode<synchronous>, transform_indices = @transform_5, window_bounds = array<i64: 64, 64>}, {pipeline_mode = #tpu.pipeline_mode<synchronous>, transform_indices = @transform_6, window_bounds = array<i64: 64, 1>}, {pipeline_mode = #tpu.pipeline_mode<synchronous>, transform_indices = @transform_7, window_bounds = array<i64: 2, 64>}, {pipeline_mode = #tpu.pipeline_mode<synchronous>, transform_indices = @transform_8, window_bounds = array<i64: 2, 1>}, {transform_indices = @transform_9, window_bounds = array<i64: 2, 128>}]} {
    %c0 = arith.constant 0 : index
    %c0_0 = arith.constant 0 : index
    %0 = vector.load %arg1[%c0, %c0_0] : memref<4x128xf32, #tpu.memory_space<vmem>>, vector<4x128xf32>
    %c0_1 = arith.constant 0 : index
    %c0_2 = arith.constant 0 : index
    %1 = vector.load %arg2[%c0_1, %c0_2] : memref<64x4xf32, #tpu.memory_space<vmem>>, vector<64x4xf32>
    %2 = vector.extract_strided_slice %1 {offsets = [0, 0], sizes = [64, 1], strides = [1, 1]} : vector<64x4xf32> to vector<64x1xf32>
    %3 = vector.extract_strided_slice %0 {offsets = [0, 0], sizes = [1, 128], strides = [1, 1]} : vector<4x128xf32> to vector<1x128xf32>
    %4 = vector.broadcast %2 : vector<64x1xf32> to vector<64x128xf32>
    %5 = vector.broadcast %3 : vector<1x128xf32> to vector<64x128xf32>
    %6 = arith.mulf %4, %5 : vector<64x128xf32>
    %7 = vector.extract_strided_slice %1 {offsets = [0, 1], sizes = [64, 1], strides = [1, 1]} : vector<64x4xf32> to vector<64x1xf32>
    %8 = vector.extract_strided_slice %0 {offsets = [1, 0], sizes = [1, 128], strides = [1, 1]} : vector<4x128xf32> to vector<1x128xf32>
    %9 = vector.broadcast %7 : vector<64x1xf32> to vector<64x128xf32>
    %10 = vector.broadcast %8 : vector<1x128xf32> to vector<64x128xf32>
    %11 = arith.mulf %9, %10 : vector<64x128xf32>
    %12 = arith.addf %6, %11 : vector<64x128xf32>
    %13 = vector.extract_strided_slice %1 {offsets = [0, 2], sizes = [64, 1], strides = [1, 1]} : vector<64x4xf32> to vector<64x1xf32>
    %14 = vector.extract_strided_slice %0 {offsets = [2, 0], sizes = [1, 128], strides = [1, 1]} : vector<4x128xf32> to vector<1x128xf32>
    %15 = vector.broadcast %13 : vector<64x1xf32> to vector<64x128xf32>
    %16 = vector.broadcast %14 : vector<1x128xf32> to vector<64x128xf32>
    %17 = arith.mulf %15, %16 : vector<64x128xf32>
    %18 = arith.addf %12, %17 : vector<64x128xf32>
    %19 = vector.extract_strided_slice %1 {offsets = [0, 3], sizes = [64, 1], strides = [1, 1]} : vector<64x4xf32> to vector<64x1xf32>
    %20 = vector.extract_strided_slice %0 {offsets = [3, 0], sizes = [1, 128], strides = [1, 1]} : vector<4x128xf32> to vector<1x128xf32>
    %21 = vector.broadcast %19 : vector<64x1xf32> to vector<64x128xf32>
    %22 = vector.broadcast %20 : vector<1x128xf32> to vector<64x128xf32>
    %23 = arith.mulf %21, %22 : vector<64x128xf32>
    %24 = arith.addf %18, %23 : vector<64x128xf32>
    %c0_3 = arith.constant 0 : index
    %c0_4 = arith.constant 0 : index
    %25 = vector.load %arg3[%c0_3, %c0_4] : memref<64x1xf32, #tpu.memory_space<vmem>>, vector<64x1xf32>
    %26 = vector.broadcast %25 : vector<64x1xf32> to vector<64x128xf32>
    %27 = arith.addf %24, %26 : vector<64x128xf32>
    %cst = arith.constant 0.000000e+00 : f32
    %28 = vector.broadcast %cst : f32 to vector<64x128xf32>
    %29 = arith.maximumf %27, %28 : vector<64x128xf32>
    %c0_5 = arith.constant 0 : index
    %c0_6 = arith.constant 0 : index
    %30 = vector.load %arg4[%c0_5, %c0_6] : memref<64x64xf32, #tpu.memory_space<vmem>>, vector<64x64xf32>
    %cst_7 = arith.constant dense<0.000000e+00> : vector<64x128xf32>
    %31 = tpu.matmul %30, %29, %cst_7 {dimension_numbers = #tpu.dot_dimension_numbers<[1], [0], [0], [1], [0, 0, 1, 1], [], []>} : vector<64x64xf32>, vector<64x128xf32>, vector<64x128xf32> -> vector<64x128xf32>
    %c0_8 = arith.constant 0 : index
    %c0_9 = arith.constant 0 : index
    %32 = vector.load %arg5[%c0_8, %c0_9] : memref<64x1xf32, #tpu.memory_space<vmem>>, vector<64x1xf32>
    %33 = vector.broadcast %32 : vector<64x1xf32> to vector<64x128xf32>
    %34 = arith.addf %31, %33 : vector<64x128xf32>
    %cst_10 = arith.constant 0.000000e+00 : f32
    %35 = vector.broadcast %cst_10 : f32 to vector<64x128xf32>
    %36 = arith.maximumf %34, %35 : vector<64x128xf32>
    %c0_11 = arith.constant 0 : index
    %c0_12 = arith.constant 0 : index
    %37 = vector.load %arg6[%c0_11, %c0_12] : memref<64x64xf32, #tpu.memory_space<vmem>>, vector<64x64xf32>
    %cst_13 = arith.constant dense<0.000000e+00> : vector<64x128xf32>
    %38 = tpu.matmul %37, %36, %cst_13 {dimension_numbers = #tpu.dot_dimension_numbers<[1], [0], [0], [1], [0, 0, 1, 1], [], []>} : vector<64x64xf32>, vector<64x128xf32>, vector<64x128xf32> -> vector<64x128xf32>
    %c0_14 = arith.constant 0 : index
    %c0_15 = arith.constant 0 : index
    %39 = vector.load %arg7[%c0_14, %c0_15] : memref<64x1xf32, #tpu.memory_space<vmem>>, vector<64x1xf32>
    %40 = vector.broadcast %39 : vector<64x1xf32> to vector<64x128xf32>
    %41 = arith.addf %38, %40 : vector<64x128xf32>
    %cst_16 = arith.constant 0.000000e+00 : f32
    %42 = vector.broadcast %cst_16 : f32 to vector<64x128xf32>
    %43 = arith.maximumf %41, %42 : vector<64x128xf32>
    %c0_17 = arith.constant 0 : index
    %c0_18 = arith.constant 0 : index
    %44 = vector.load %arg8[%c0_17, %c0_18] : memref<2x64xf32, #tpu.memory_space<vmem>>, vector<2x64xf32>
    %cst_19 = arith.constant dense<0.000000e+00> : vector<2x128xf32>
    %45 = tpu.matmul %44, %43, %cst_19 {dimension_numbers = #tpu.dot_dimension_numbers<[1], [0], [0], [1], [0, 0, 1, 1], [], []>} : vector<2x64xf32>, vector<64x128xf32>, vector<2x128xf32> -> vector<2x128xf32>
    %c0_20 = arith.constant 0 : index
    %c0_21 = arith.constant 0 : index
    %46 = vector.load %arg9[%c0_20, %c0_21] : memref<2x1xf32, #tpu.memory_space<vmem>>, vector<2x1xf32>
    %47 = vector.broadcast %46 : vector<2x1xf32> to vector<2x128xf32>
    %48 = arith.addf %45, %47 : vector<2x128xf32>
    %c0_22 = arith.constant 0 : index
    %c0_23 = arith.constant 0 : index
    %49 = vector.load %arg10[%c0_22, %c0_23] : memref<2x128xf32, #tpu.memory_space<vmem>>, vector<2x128xf32>
    tpu.vector_store %arg10[%c0_22, %c0_23], %48 {strides = array<i32>} : memref<2x128xf32, #tpu.memory_space<vmem>>, vector<2x128xf32>,
    return
  }
  func.func @transform_0(%arg0: i32) -> (i32, i32) {
    %c0_i32 = arith.constant 0 : i32
    %c0_i32_0 = arith.constant 0 : i32
    return %c0_i32, %arg0 : i32, i32
  }
  func.func @transform_1(%arg0: i32) -> (i32, i32) {
    %c0_i32 = arith.constant 0 : i32
    %c0_i32_0 = arith.constant 0 : i32
    %c0_i32_1 = arith.constant 0 : i32
    return %c0_i32, %c0_i32_0 : i32, i32
  }
  func.func @transform_2(%arg0: i32) -> (i32, i32) {
    %c0_i32 = arith.constant 0 : i32
    %c0_i32_0 = arith.constant 0 : i32
    %c0_i32_1 = arith.constant 0 : i32
    return %c0_i32, %c0_i32_0 : i32, i32
  }
  func.func @transform_3(%arg0: i32) -> (i32, i32) {
    %c0_i32 = arith.constant 0 : i32
    %c0_i32_0 = arith.constant 0 : i32
    %c0_i32_1 = arith.constant 0 : i32
    return %c0_i32, %c0_i32_0 : i32, i32
  }
  func.func @transform_4(%arg0: i32) -> (i32, i32) {
    %c0_i32 = arith.constant 0 : i32
    %c0_i32_0 = arith.constant 0 : i32
    %c0_i32_1 = arith.constant 0 : i32
    return %c0_i32, %c0_i32_0 : i32, i32
  }
  func.func @transform_5(%arg0: i32) -> (i32, i32) {
    %c0_i32 = arith.constant 0 : i32
    %c0_i32_0 = arith.constant 0 : i32
    %c0_i32_1 = arith.constant 0 : i32
    return %c0_i32, %c0_i32_0 : i32, i32
  }
  func.func @transform_6(%arg0: i32) -> (i32, i32) {
    %c0_i32 = arith.constant 0 : i32
    %c0_i32_0 = arith.constant 0 : i32
    %c0_i32_1 = arith.constant 0 : i32
    return %c0_i32, %c0_i32_0 : i32, i32
  }
  func.func @transform_7(%arg0: i32) -> (i32, i32) {
    %c0_i32 = arith.constant 0 : i32
    %c0_i32_0 = arith.constant 0 : i32
    %c0_i32_1 = arith.constant 0 : i32
    return %c0_i32, %c0_i32_0 : i32, i32
  }
  func.func @transform_8(%arg0: i32) -> (i32, i32) {
    %c0_i32 = arith.constant 0 : i32
    %c0_i32_0 = arith.constant 0 : i32
    %c0_i32_1 = arith.constant 0 : i32
    return %c0_i32, %c0_i32_0 : i32, i32
  }
  func.func @transform_9(%arg0: i32) -> (i32, i32) {
    %c0_i32 = arith.constant 0 : i32
    %c0_i32_0 = arith.constant 0 : i32
    return %c0_i32, %arg0 : i32, i32
  }
}

</mosaic_0001>

<llo_original>
// kernel: tpu_custom_call.1
$region0: #{tpu_custom_call.1}
  #allocation0 [shape = 'u32[]', space=smem, size = 0x4, offset = 0x4, fixed_abs, tag = 'smem constant byte address 0x4 - core index']
  #allocation1 [shape = 'u32[72,128]{1,0:T(1,128)}', space=vmem, size = 0x9000, scoped, tag = 'internal scratch']
  %s0 = inlined_call_operand.vmem [shape: f32[4,128], index: 0, kind: input, shape index: {}]
  %s1 = inlined_call_operand.vmem [shape: f32[64,4], index: 1, kind: input, shape index: {}]
  %s2 = inlined_call_operand.vmem [shape: f32[64,1], index: 2, kind: input, shape index: {}]
  %s3 = inlined_call_operand.vmem [shape: f32[64,64], index: 3, kind: input, shape index: {}]
  %s4 = inlined_call_operand.vmem [shape: f32[64,1], index: 4, kind: input, shape index: {}]
  %s5 = inlined_call_operand.vmem [shape: f32[64,64], index: 5, kind: input, shape index: {}]
  %s6 = inlined_call_operand.vmem [shape: f32[64,1], index: 6, kind: input, shape index: {}]
  %s7 = inlined_call_operand.vmem [shape: f32[2,64], index: 7, kind: input, shape index: {}]
  %s8 = inlined_call_operand.vmem [shape: f32[2,1], index: 8, kind: input, shape index: {}]
  %s9 = inlined_call_operand.hbm [shape: f32[2,128], index: 9, kind: output, shape index: {}]
  %s10 = sld [smem:[#allocation0]]
  $region46: #{tpu_custom_call.1} parent=0
    _
  %s12 = ssub.s32 1, %s10
  %s13 = scalar_select 0, %s12, %s10
  $region1: #{tpu_custom_call.1} parent=0
    #allocation2 [shape = 'u8[1024]{0}', space=vmem, size = 0x400, scoped, tag = 'output window, operand 0, single buffered']
    #allocation3 [shape = 's32[1]{0}', space=sflag, size = 0x4, scoped, tag = 'scoped memory for tpu_custom_call.1']
    %14 = vsyncpa [#allocation3], 0
    // Predicated region
    $region2: #{tpu_custom_call.1} parent=1 // pred_check
      _
    $region3: #{tpu_custom_call.1} parent=1 // pred_check_branch
      %16 = sbr.rel (0) target = $region5
    $region4: #{tpu_custom_call.1} parent=1 // pred_region
      _
    $region5: #{tpu_custom_call.1} parent=1 // pred_fallthru
      _
    // Predicated region
    $region6: #{tpu_custom_call.1} parent=1 // pred_check
      _
    $region7: #{tpu_custom_call.1} parent=1 // pred_check_branch
      %18 = sbr.rel (0) target = $region9
    $region8: #{tpu_custom_call.1} parent=1 // pred_region
      _
    $region9: #{tpu_custom_call.1} parent=1 // pred_fallthru
      _
    // Predicated region
    $region10: #{tpu_custom_call.1} parent=1 // pred_check
      _
    $region11: #{tpu_custom_call.1} parent=1 // pred_check_branch
      %20 = sbr.rel (0) target = $region13
    $region12: #{tpu_custom_call.1} parent=1 // pred_region
      _
    $region13: #{tpu_custom_call.1} parent=1 // pred_fallthru
      _
    // Predicated region
    $region14: #{tpu_custom_call.1} parent=1 // pred_check
      _
    $region15: #{tpu_custom_call.1} parent=1 // pred_check_branch
      %22 = sbr.rel (0) target = $region17
    $region16: #{tpu_custom_call.1} parent=1 // pred_region
      _
    $region17: #{tpu_custom_call.1} parent=1 // pred_fallthru
      _
    // Predicated region
    $region18: #{tpu_custom_call.1} parent=1 // pred_check
      _
    $region19: #{tpu_custom_call.1} parent=1 // pred_check_branch
      %24 = sbr.rel (0) target = $region21
    $region20: #{tpu_custom_call.1} parent=1 // pred_region
      _
    $region21: #{tpu_custom_call.1} parent=1 // pred_fallthru
      _
    // Predicated region
    $region22: #{tpu_custom_call.1} parent=1 // pred_check
      _
    $region23: #{tpu_custom_call.1} parent=1 // pred_check_branch
      %26 = sbr.rel (0) target = $region25
    $region24: #{tpu_custom_call.1} parent=1 // pred_region
      _
    $region25: #{tpu_custom_call.1} parent=1 // pred_fallthru
      _
    // Predicated region
    $region26: #{tpu_custom_call.1} parent=1 // pred_check
      _
    $region27: #{tpu_custom_call.1} parent=1 // pred_check_branch
      %28 = sbr.rel (0) target = $region29
    $region28: #{tpu_custom_call.1} parent=1 // pred_region
      _
    $region29: #{tpu_custom_call.1} parent=1 // pred_fallthru
      _
    // Predicated region
    $region30: #{tpu_custom_call.1} parent=1 // pred_check
      _
    $region31: #{tpu_custom_call.1} parent=1 // pred_check_branch
      %30 = sbr.rel (0) target = $region33
    $region32: #{tpu_custom_call.1} parent=1 // pred_region
      _
    $region33: #{tpu_custom_call.1} parent=1 // pred_fallthru
      _
    // Predicated region
    $region34: #{tpu_custom_call.1} parent=1 // pred_check
      _
    $region35: #{tpu_custom_call.1} parent=1 // pred_check_branch
      %32 = sbr.rel (0) target = $region37
    $region36: #{tpu_custom_call.1} parent=1 // pred_region
      _
    $region37: #{tpu_custom_call.1} parent=1 // pred_fallthru
      _
    %v33 = vld [vmem:[%s0] sm:$0xf]
    %v34 = vld [vmem:[%s1] sm:$0xff]
    %v35 = vld [vmem:[%s1 + $0x8] sm:$0xff]
    %v36 = vld [vmem:[%s1 + $0x10] sm:$0xff]
    %v37 = vld [vmem:[%s1 + $0x18] sm:$0xff]
    %v38 = vld [vmem:[%s1 + $0x20] sm:$0xff]
    %v39 = vld [vmem:[%s1 + $0x28] sm:$0xff]
    %v40 = vld [vmem:[%s1 + $0x30] sm:$0xff]
    %v41 = vld [vmem:[%s1 + $0x38] sm:$0xff]
    %43 = vset.pattern.permute.xlu0 0
    %44 = vperm.xlu0 %43, %v34
    %v45 = vpop.permute.xlu0 %44
    %48 = vset.pattern.permute.xlu0 0
    %49 = vperm.xlu0 %48, %v35
    %v50 = vpop.permute.xlu0 %49
    %53 = vset.pattern.permute.xlu0 0
    %54 = vperm.xlu0 %53, %v36
    %v55 = vpop.permute.xlu0 %54
    %58 = vset.pattern.permute.xlu0 0
    %59 = vperm.xlu0 %58, %v37
    %v60 = vpop.permute.xlu0 %59
    %63 = vset.pattern.permute.xlu0 0
    %64 = vperm.xlu0 %63, %v38
    %v65 = vpop.permute.xlu0 %64
    %68 = vset.pattern.permute.xlu0 0
    %69 = vperm.xlu0 %68, %v39
    %v70 = vpop.permute.xlu0 %69
    %73 = vset.pattern.permute.xlu0 0
    %74 = vperm.xlu0 %73, %v40
    %v75 = vpop.permute.xlu0 %74
    %78 = vset.pattern.permute.xlu0 0
    %79 = vperm.xlu0 %78, %v41
    %v80 = vpop.permute.xlu0 %79
    %v82 = vperm.slane %v33, 0
    %v83 = vmul.f32 %v45, %v82
    %v84 = vmul.f32 %v50, %v82
    %v85 = vmul.f32 %v55, %v82
    %v86 = vmul.f32 %v60, %v82
    %v87 = vmul.f32 %v65, %v82
    %v88 = vmul.f32 %v70, %v82
    %v89 = vmul.f32 %v75, %v82
    %v90 = vmul.f32 %v80, %v82
    %91 = vset.pattern.permute.xlu0 1
    %92 = vperm.xlu0 %91, %v34
    %v93 = vpop.permute.xlu0 %92
    %95 = vset.pattern.permute.xlu0 1
    %96 = vperm.xlu0 %95, %v35
    %v97 = vpop.permute.xlu0 %96
    %99 = vset.pattern.permute.xlu0 1
    %100 = vperm.xlu0 %99, %v36
    %v101 = vpop.permute.xlu0 %100
    %103 = vset.pattern.permute.xlu0 1
    %104 = vperm.xlu0 %103, %v37
    %v105 = vpop.permute.xlu0 %104
    %107 = vset.pattern.permute.xlu0 1
    %108 = vperm.xlu0 %107, %v38
    %v109 = vpop.permute.xlu0 %108
    %111 = vset.pattern.permute.xlu0 1
    %112 = vperm.xlu0 %111, %v39
    %v113 = vpop.permute.xlu0 %112
    %115 = vset.pattern.permute.xlu0 1
    %116 = vperm.xlu0 %115, %v40
    %v117 = vpop.permute.xlu0 %116
    %119 = vset.pattern.permute.xlu0 1
    %120 = vperm.xlu0 %119, %v41
    %v121 = vpop.permute.xlu0 %120
    %v123 = vperm.slane %v33, 1
    %v124 = vmul.f32 %v93, %v123
    %v125 = vmul.f32 %v97, %v123
    %v126 = vmul.f32 %v101, %v123
    %v127 = vmul.f32 %v105, %v123
    %v128 = vmul.f32 %v109, %v123
    %v129 = vmul.f32 %v113, %v123
    %v130 = vmul.f32 %v117, %v123
    %v131 = vmul.f32 %v121, %v123
    %v132 = vadd.f32 %v83, %v124
    %v133 = vadd.f32 %v84, %v125
    %v134 = vadd.f32 %v85, %v126
    %v135 = vadd.f32 %v86, %v127
    %v136 = vadd.f32 %v87, %v128
    %v137 = vadd.f32 %v88, %v129
    %v138 = vadd.f32 %v89, %v130
    %v139 = vadd.f32 %v90, %v131
    %140 = vset.pattern.permute.xlu0 2
    %141 = vperm.xlu0 %140, %v34
    %v142 = vpop.permute.xlu0 %141
    %144 = vset.pattern.permute.xlu0 2
    %145 = vperm.xlu0 %144, %v35
    %v146 = vpop.permute.xlu0 %145
    %148 = vset.pattern.permute.xlu0 2
    %149 = vperm.xlu0 %148, %v36
    %v150 = vpop.permute.xlu0 %149
    %152 = vset.pattern.permute.xlu0 2
    %153 = vperm.xlu0 %152, %v37
    %v154 = vpop.permute.xlu0 %153
    %156 = vset.pattern.permute.xlu0 2
    %157 = vperm.xlu0 %156, %v38
    %v158 = vpop.permute.xlu0 %157
    %160 = vset.pattern.permute.xlu0 2
    %161 = vperm.xlu0 %160, %v39
    %v162 = vpop.permute.xlu0 %161
    %164 = vset.pattern.permute.xlu0 2
    %165 = vperm.xlu0 %164, %v40
    %v166 = vpop.permute.xlu0 %165
    %168 = vset.pattern.permute.xlu0 2
    %169 = vperm.xlu0 %168, %v41
    %v170 = vpop.permute.xlu0 %169
    %v172 = vperm.slane %v33, 2
    %v173 = vmul.f32 %v142, %v172
    %v174 = vmul.f32 %v146, %v172
    %v175 = vmul.f32 %v150, %v172
    %v176 = vmul.f32 %v154, %v172
    %v177 = vmul.f32 %v158, %v172
    %v178 = vmul.f32 %v162, %v172
    %v179 = vmul.f32 %v166, %v172
    %v180 = vmul.f32 %v170, %v172
    %v181 = vadd.f32 %v132, %v173
    %v182 = vadd.f32 %v133, %v174
    %v183 = vadd.f32 %v134, %v175
    %v184 = vadd.f32 %v135, %v176
    %v185 = vadd.f32 %v136, %v177
    %v186 = vadd.f32 %v137, %v178
    %v187 = vadd.f32 %v138, %v179
    %v188 = vadd.f32 %v139, %v180
    %189 = vset.pattern.permute.xlu0 3
    %190 = vperm.xlu0 %189, %v34
    %v191 = vpop.permute.xlu0 %190
    %193 = vset.pattern.permute.xlu0 3
    %194 = vperm.xlu0 %193, %v35
    %v195 = vpop.permute.xlu0 %194
    %197 = vset.pattern.permute.xlu0 3
    %198 = vperm.xlu0 %197, %v36
    %v199 = vpop.permute.xlu0 %198
    %201 = vset.pattern.permute.xlu0 3
    %202 = vperm.xlu0 %201, %v37
    %v203 = vpop.permute.xlu0 %202
    %205 = vset.pattern.permute.xlu0 3
    %206 = vperm.xlu0 %205, %v38
    %v207 = vpop.permute.xlu0 %206
    %209 = vset.pattern.permute.xlu0 3
    %210 = vperm.xlu0 %209, %v39
    %v211 = vpop.permute.xlu0 %210
    %213 = vset.pattern.permute.xlu0 3
    %214 = vperm.xlu0 %213, %v40
    %v215 = vpop.permute.xlu0 %214
    %217 = vset.pattern.permute.xlu0 3
    %218 = vperm.xlu0 %217, %v41
    %v219 = vpop.permute.xlu0 %218
    %v221 = vperm.slane %v33, 3
    %v222 = vmul.f32 %v191, %v221
    %v223 = vmul.f32 %v195, %v221
    %v224 = vmul.f32 %v199, %v221
    %v225 = vmul.f32 %v203, %v221
    %v226 = vmul.f32 %v207, %v221
    %v227 = vmul.f32 %v211, %v221
    %v228 = vmul.f32 %v215, %v221
    %v229 = vmul.f32 %v219, %v221
    %v230 = vadd.f32 %v181, %v222
    %v231 = vadd.f32 %v182, %v223
    %v232 = vadd.f32 %v183, %v224
    %v233 = vadd.f32 %v184, %v225
    %v234 = vadd.f32 %v185, %v226
    %v235 = vadd.f32 %v186, %v227
    %v236 = vadd.f32 %v187, %v228
    %v237 = vadd.f32 %v188, %v229
    %v238 = vld [vmem:[%s2] sm:$0xff]
    %v239 = vld [vmem:[%s2 + $0x8] sm:$0xff]
    %v240 = vld [vmem:[%s2 + $0x10] sm:$0xff]
    %v241 = vld [vmem:[%s2 + $0x18] sm:$0xff]
    %v242 = vld [vmem:[%s2 + $0x20] sm:$0xff]
    %v243 = vld [vmem:[%s2 + $0x28] sm:$0xff]
    %v244 = vld [vmem:[%s2 + $0x30] sm:$0xff]
    %v245 = vld [vmem:[%s2 + $0x38] sm:$0xff]
    %247 = vset.pattern.permute.xlu0 0
    %248 = vperm.xlu0 %247, %v238
    %v249 = vpop.permute.xlu0 %248
    %252 = vset.pattern.permute.xlu0 0
    %253 = vperm.xlu0 %252, %v239
    %v254 = vpop.permute.xlu0 %253
    %257 = vset.pattern.permute.xlu0 0
    %258 = vperm.xlu0 %257, %v240
    %v259 = vpop.permute.xlu0 %258
    %262 = vset.pattern.permute.xlu0 0
    %263 = vperm.xlu0 %262, %v241
    %v264 = vpop.permute.xlu0 %263
    %267 = vset.pattern.permute.xlu0 0
    %268 = vperm.xlu0 %267, %v242
    %v269 = vpop.permute.xlu0 %268
    %272 = vset.pattern.permute.xlu0 0
    %273 = vperm.xlu0 %272, %v243
    %v274 = vpop.permute.xlu0 %273
    %277 = vset.pattern.permute.xlu0 0
    %278 = vperm.xlu0 %277, %v244
    %v279 = vpop.permute.xlu0 %278
    %282 = vset.pattern.permute.xlu0 0
    %283 = vperm.xlu0 %282, %v245
    %v284 = vpop.permute.xlu0 %283
    %v286 = vadd.f32 %v230, %v249
    %v287 = vadd.f32 %v231, %v254
    %v288 = vadd.f32 %v232, %v259
    %v289 = vadd.f32 %v233, %v264
    %v290 = vadd.f32 %v234, %v269
    %v291 = vadd.f32 %v235, %v274
    %v292 = vadd.f32 %v236, %v279
    %v293 = vadd.f32 %v237, %v284
    %v294 = vmax.f32 %v286, 0.0
    %v295 = vmax.f32 %v287, 0.0
    %v296 = vmax.f32 %v288, 0.0
    %v297 = vmax.f32 %v289, 0.0
    %v298 = vmax.f32 %v290, 0.0
    %v299 = vmax.f32 %v291, 0.0
    %v300 = vmax.f32 %v292, 0.0
    %v301 = vmax.f32 %v293, 0.0
    %v302 = vld [vmem:[%s3] sm:$0xff]
    %v303 = vld [vmem:[%s3 + $0x8] sm:$0xff]
    %v304 = vld [vmem:[%s3 + $0x10] sm:$0xff]
    %v305 = vld [vmem:[%s3 + $0x18] sm:$0xff]
    %v306 = vld [vmem:[%s3 + $0x20] sm:$0xff]
    %v307 = vld [vmem:[%s3 + $0x28] sm:$0xff]
    %v308 = vld [vmem:[%s3 + $0x30] sm:$0xff]
    %v309 = vld [vmem:[%s3 + $0x38] sm:$0xff]
    %v310 = vld [vmem:[%s4] sm:$0xff]
    %v311 = vld [vmem:[%s4 + $0x8] sm:$0xff]
    %v312 = vld [vmem:[%s4 + $0x10] sm:$0xff]
    %v313 = vld [vmem:[%s4 + $0x18] sm:$0xff]
    %v314 = vld [vmem:[%s4 + $0x20] sm:$0xff]
    %v315 = vld [vmem:[%s4 + $0x28] sm:$0xff]
    %v316 = vld [vmem:[%s4 + $0x30] sm:$0xff]
    %v317 = vld [vmem:[%s4 + $0x38] sm:$0xff]
    %319 = vset.pattern.permute.xlu0 0
    %320 = vperm.xlu0 %319, %v310
    %v321 = vpop.permute.xlu0 %320
    %324 = vset.pattern.permute.xlu0 0
    %325 = vperm.xlu0 %324, %v311
    %v326 = vpop.permute.xlu0 %325
    %329 = vset.pattern.permute.xlu0 0
    %330 = vperm.xlu0 %329, %v312
    %v331 = vpop.permute.xlu0 %330
    %334 = vset.pattern.permute.xlu0 0
    %335 = vperm.xlu0 %334, %v313
    %v336 = vpop.permute.xlu0 %335
    %339 = vset.pattern.permute.xlu0 0
    %340 = vperm.xlu0 %339, %v314
    %v341 = vpop.permute.xlu0 %340
    %344 = vset.pattern.permute.xlu0 0
    %345 = vperm.xlu0 %344, %v315
    %v346 = vpop.permute.xlu0 %345
    %349 = vset.pattern.permute.xlu0 0
    %350 = vperm.xlu0 %349, %v316
    %v351 = vpop.permute.xlu0 %350
    %354 = vset.pattern.permute.xlu0 0
    %355 = vperm.xlu0 %354, %v317
    %v356 = vpop.permute.xlu0 %355
    %vm358 = vcmask 523264
    %v360 = vsel %vm358, %v302, 0
    %v363 = vsel %vm358, %v303, 0
    %v366 = vsel %vm358, %v304, 0
    %v369 = vsel %vm358, %v305, 0
    %v372 = vsel %vm358, %v306, 0
    %v375 = vsel %vm358, %v307, 0
    %v378 = vsel %vm358, %v308, 0
    %v381 = vsel %vm358, %v309, 0
    %383 = vmatpush.msra.mxu0 0.0
    %384 = vmatpush.msra.mxu0 0.0
    %385 = vmatpush.msra.mxu0 0.0
    %386 = vmatpush.msra.mxu0 0.0
    %387 = vmatpush.msra.mxu0 0.0
    %388 = vmatpush.msra.mxu0 0.0
    %389 = vmatpush.msra.mxu0 0.0
    %390 = vmatpush.msra.mxu0 0.0
    %391 = vmatpush.msra.mxu0 %v301
    %392 = vmatpush.msra.mxu0 %v300
    %393 = vmatpush.msra.mxu0 %v299
    %394 = vmatpush.msra.mxu0 %v298
    %395 = vmatpush.msra.mxu0 %v297
    %396 = vmatpush.msra.mxu0 %v296
    %397 = vmatpush.msra.mxu0 %v295
    %398 = vmatpush.msra.mxu0 %v294
    %399 = vmatmul.f32.gmra.mxu0 %v360
    %v400 = vpop.f32.mrf.mxu0
    %v401 = vadd.f32 %v321, %v400
    %402 = vmatmul.f32.gmra.mxu0 %v363
    %v403 = vpop.f32.mrf.mxu0
    %v404 = vadd.f32 %v326, %v403
    %405 = vmatmul.f32.gmra.mxu0 %v366
    %v406 = vpop.f32.mrf.mxu0
    %v407 = vadd.f32 %v331, %v406
    %408 = vmatmul.f32.gmra.mxu0 %v369
    %v409 = vpop.f32.mrf.mxu0
    %v410 = vadd.f32 %v336, %v409
    %411 = vmatmul.f32.gmra.mxu0 %v372
    %v412 = vpop.f32.mrf.mxu0
    %v413 = vadd.f32 %v341, %v412
    %414 = vmatmul.f32.gmra.mxu0 %v375
    %v415 = vpop.f32.mrf.mxu0
    %v416 = vadd.f32 %v346, %v415
    %417 = vmatmul.f32.gmra.mxu0 %v378
    %v418 = vpop.f32.mrf.mxu0
    %v419 = vadd.f32 %v351, %v418
    %420 = vmatmul.f32.gmra.mxu0 %v381
    %v421 = vpop.f32.mrf.mxu0
    %v422 = vadd.f32 %v356, %v421
    %423 = vdwg.mxu0
    %v424 = vmax.f32 %v401, 0.0
    %v425 = vmax.f32 %v404, 0.0
    %v426 = vmax.f32 %v407, 0.0
    %v427 = vmax.f32 %v410, 0.0
    %v428 = vmax.f32 %v413, 0.0
    %v429 = vmax.f32 %v416, 0.0
    %v430 = vmax.f32 %v419, 0.0
    %v431 = vmax.f32 %v422, 0.0
    %v432 = vld [vmem:[%s5] sm:$0xff]
    %v433 = vld [vmem:[%s5 + $0x8] sm:$0xff]
    %v434 = vld [vmem:[%s5 + $0x10] sm:$0xff]
    %v435 = vld [vmem:[%s5 + $0x18] sm:$0xff]
    %v436 = vld [vmem:[%s5 + $0x20] sm:$0xff]
    %v437 = vld [vmem:[%s5 + $0x28] sm:$0xff]
    %v438 = vld [vmem:[%s5 + $0x30] sm:$0xff]
    %v439 = vld [vmem:[%s5 + $0x38] sm:$0xff]
    %v440 = vld [vmem:[%s6] sm:$0xff]
    %v441 = vld [vmem:[%s6 + $0x8] sm:$0xff]
    %v442 = vld [vmem:[%s6 + $0x10] sm:$0xff]
    %v443 = vld [vmem:[%s6 + $0x18] sm:$0xff]
    %v444 = vld [vmem:[%s6 + $0x20] sm:$0xff]
    %v445 = vld [vmem:[%s6 + $0x28] sm:$0xff]
    %v446 = vld [vmem:[%s6 + $0x30] sm:$0xff]
    %v447 = vld [vmem:[%s6 + $0x38] sm:$0xff]
    %449 = vset.pattern.permute.xlu0 0
    %450 = vperm.xlu0 %449, %v440
    %v451 = vpop.permute.xlu0 %450
    %454 = vset.pattern.permute.xlu0 0
    %455 = vperm.xlu0 %454, %v441
    %v456 = vpop.permute.xlu0 %455
    %459 = vset.pattern.permute.xlu0 0
    %460 = vperm.xlu0 %459, %v442
    %v461 = vpop.permute.xlu0 %460
    %464 = vset.pattern.permute.xlu0 0
    %465 = vperm.xlu0 %464, %v443
    %v466 = vpop.permute.xlu0 %465
    %469 = vset.pattern.permute.xlu0 0
    %470 = vperm.xlu0 %469, %v444
    %v471 = vpop.permute.xlu0 %470
    %474 = vset.pattern.permute.xlu0 0
    %475 = vperm.xlu0 %474, %v445
    %v476 = vpop.permute.xlu0 %475
    %479 = vset.pattern.permute.xlu0 0
    %480 = vperm.xlu0 %479, %v446
    %v481 = vpop.permute.xlu0 %480
    %484 = vset.pattern.permute.xlu0 0
    %485 = vperm.xlu0 %484, %v447
    %v486 = vpop.permute.xlu0 %485
    %v489 = vsel %vm358, %v432, 0
    %v492 = vsel %vm358, %v433, 0
    %v495 = vsel %vm358, %v434, 0
    %v498 = vsel %vm358, %v435, 0
    %v501 = vsel %vm358, %v436, 0
    %v504 = vsel %vm358, %v437, 0
    %v507 = vsel %vm358, %v438, 0
    %v510 = vsel %vm358, %v439, 0
    %512 = vmatpush.msra.mxu0 0.0
    %513 = vmatpush.msra.mxu0 0.0
    %514 = vmatpush.msra.mxu0 0.0
    %515 = vmatpush.msra.mxu0 0.0
    %516 = vmatpush.msra.mxu0 0.0
    %517 = vmatpush.msra.mxu0 0.0
    %518 = vmatpush.msra.mxu0 0.0
    %519 = vmatpush.msra.mxu0 0.0
    %520 = vmatpush.msra.mxu0 %v431
    %521 = vmatpush.msra.mxu0 %v430
    %522 = vmatpush.msra.mxu0 %v429
    %523 = vmatpush.msra.mxu0 %v428
    %524 = vmatpush.msra.mxu0 %v427
    %525 = vmatpush.msra.mxu0 %v426
    %526 = vmatpush.msra.mxu0 %v425
    %527 = vmatpush.msra.mxu0 %v424
    %528 = vmatmul.f32.gmra.mxu0 %v489
    %v529 = vpop.f32.mrf.mxu0
    %v530 = vadd.f32 %v451, %v529
    %531 = vmatmul.f32.gmra.mxu0 %v492
    %v532 = vpop.f32.mrf.mxu0
    %v533 = vadd.f32 %v456, %v532
    %534 = vmatmul.f32.gmra.mxu0 %v495
    %v535 = vpop.f32.mrf.mxu0
    %v536 = vadd.f32 %v461, %v535
    %537 = vmatmul.f32.gmra.mxu0 %v498
    %v538 = vpop.f32.mrf.mxu0
    %v539 = vadd.f32 %v466, %v538
    %540 = vmatmul.f32.gmra.mxu0 %v501
    %v541 = vpop.f32.mrf.mxu0
    %v542 = vadd.f32 %v471, %v541
    %543 = vmatmul.f32.gmra.mxu0 %v504
    %v544 = vpop.f32.mrf.mxu0
    %v545 = vadd.f32 %v476, %v544
    %546 = vmatmul.f32.gmra.mxu0 %v507
    %v547 = vpop.f32.mrf.mxu0
    %v548 = vadd.f32 %v481, %v547
    %549 = vmatmul.f32.gmra.mxu0 %v510
    %v550 = vpop.f32.mrf.mxu0
    %v551 = vadd.f32 %v486, %v550
    %552 = vdwg.mxu0
    %v553 = vmax.f32 %v530, 0.0
    %v554 = vmax.f32 %v533, 0.0
    %v555 = vmax.f32 %v536, 0.0
    %v556 = vmax.f32 %v539, 0.0
    %v557 = vmax.f32 %v542, 0.0
    %v558 = vmax.f32 %v545, 0.0
    %v559 = vmax.f32 %v548, 0.0
    %v560 = vmax.f32 %v551, 0.0
    %v561 = vld [vmem:[%s7] sm:$0x3]
    %v562 = vld [vmem:[%s8] sm:$0x3]
    %564 = vset.pattern.permute.xlu0 0
    %565 = vperm.xlu0 %564, %v562
    %v566 = vpop.permute.xlu0 %565
    %v569 = vsel %vm358, %v561, 0
    %571 = vmatpush.msra.mxu0 0.0
    %572 = vmatpush.msra.mxu0 0.0
    %573 = vmatpush.msra.mxu0 0.0
    %574 = vmatpush.msra.mxu0 0.0
    %575 = vmatpush.msra.mxu0 0.0
    %576 = vmatpush.msra.mxu0 0.0
    %577 = vmatpush.msra.mxu0 0.0
    %578 = vmatpush.msra.mxu0 0.0
    %579 = vmatpush.msra.mxu0 %v560
    %580 = vmatpush.msra.mxu0 %v559
    %581 = vmatpush.msra.mxu0 %v558
    %582 = vmatpush.msra.mxu0 %v557
    %583 = vmatpush.msra.mxu0 %v556
    %584 = vmatpush.msra.mxu0 %v555
    %585 = vmatpush.msra.mxu0 %v554
    %586 = vmatpush.msra.mxu0 %v553
    %587 = vmatmul.f32.gmra.mxu0 %v569
    %v588 = vpop.f32.mrf.mxu0
    %v589 = vadd.f32 %v566, %v588
    %590 = vdwg.mxu0
    %591 = vst [vmem:[#allocation2] sm:$0x3] %v589
    // Predicated region
    $region38: #{tpu_custom_call.1} parent=1 // pred_check
      _
    $region39: #{tpu_custom_call.1} parent=1 // pred_check_branch
      %593 = sbr.rel (0) target = $region41
    $region40: #{tpu_custom_call.1} parent=1 // pred_region
      %595 = vsyncadd [#allocation3], 0
      %s597 = sshll.u32 [#allocation2], 4
      %s598 = int_to_ptr.vmem [resolvable:$true] %s597
      %s599 = sshll.u32 %s9, 4
      %s600 = int_to_ptr.hbm [resolvable:$true] %s599
      %602 = dma.vmem_to_hbm [thread:$0]  %s598, 32, %s600, [#allocation3]
    $region41: #{tpu_custom_call.1} parent=1 // pred_fallthru
      _
    // Predicated region
    $region42: #{tpu_custom_call.1} parent=1 // pred_check
      _
    $region43: #{tpu_custom_call.1} parent=1 // pred_check_branch
      %604 = sbr.rel (0) target = $region45
    $region44: #{tpu_custom_call.1} parent=1 // pred_region
      %606 = dma.done [#allocation3], 32
    $region45: #{tpu_custom_call.1} parent=1 // pred_fallthru
      _
    %607 = vsyncpa [#allocation3], 1

</llo_original>
